<compile_context>
chip_gen: v7x
topology: tpu7x:2x2x1
jax: 0.10.0
libtpu: 0.0.40
codegen_flags: <defaults>
</compile_context>

<pallas_src>
import functools

import numpy as np
import jax
import jax.numpy as jnp
from jax.experimental import pallas as pl
from jax.experimental.pallas import tpu as pltpu

# ---- generator dimensions (TPU-tile friendly: last dims multiples of 128) ---
Z_DIM = 128            # latent dim
HIDDEN = 256           # hidden dim
C, IH, IW = 1, 16, 16
OUT_DIM = C * IH * IW  # 256 (lane-dense output slab)


def _generator_kernel(z_ref, w1_ref, b1_ref, w2_ref, b2_ref, x_ref):
    """One batch tile: x = tanh(relu(z @ W1 + b1) @ W2 + b2)."""
    # MXU matmuls with bf16 operands, f32 accumulation.
    h = jnp.dot(z_ref[...], w1_ref[...],
                preferred_element_type=jnp.float32)        # (TM, HIDDEN)
    h = jnp.maximum(h + b1_ref[...], 0.0)                  # bias + ReLU, f32 (VPU)
    o = jnp.dot(h.astype(jnp.bfloat16), w2_ref[...],
                preferred_element_type=jnp.float32)        # (TM, OUT_DIM)
    x_ref[...] = jnp.tanh(o + b2_ref[...])                 # bias + tanh, f32 (EUP)


def _pad_and_tile(m):
    """Choose padded batch and batch tile.

    m <= 256  -> one full-batch tile (grid=(1,)): no per-step pipeline overhead,
                 no repeated weight touches on single-TC v5e/v6e.
    m  > 256  -> 256-row tiles: fills the 256-row MXU on v6e/v7x and gives v7x's
                 two TensorCores independent tiles to split.
    """
    if m <= 256:
        m_pad = max(8, -(-m // 8) * 8)      # sublane multiple
        return m_pad, m_pad
    m_pad = -(-m // 256) * 256
    return m_pad, 256


@functools.partial(jax.jit, static_argnums=(0, 1, 2))
def _generate(m, m_pad, tm, key, w1, b1, w2, b2):
    """Single compiled executable: z ~ N(0,1) + fused 2-layer generator."""
    # bf16 latent: MXU-native operand dtype, half the z HBM traffic.
    z = jax.random.normal(key, (m_pad, Z_DIM), dtype=jnp.bfloat16)
    n_tiles = m_pad // tm
    x = pl.pallas_call(
        _generator_kernel,
        out_shape=jax.ShapeDtypeStruct((m_pad, OUT_DIM), jnp.float32),
        grid=(n_tiles,),
        in_specs=[
            pl.BlockSpec((tm, Z_DIM), lambda i: (i, 0)),         # z tile (bf16)
            pl.BlockSpec((Z_DIM, HIDDEN), lambda i: (0, 0)),     # W1, VMEM-resident
            pl.BlockSpec((1, HIDDEN), lambda i: (0, 0)),         # b1 (f32)
            pl.BlockSpec((HIDDEN, OUT_DIM), lambda i: (0, 0)),   # W2, VMEM-resident
            pl.BlockSpec((1, OUT_DIM), lambda i: (0, 0)),        # b2 (f32)
        ],
        out_specs=pl.BlockSpec((tm, OUT_DIM), lambda i: (i, 0)),
        compiler_params=pltpu.CompilerParams(
            dimension_semantics=("parallel",),   # batch tiles are independent
        ),
    )(z, w1, b1, w2, b2)
    return x[:m]          # drop padded rows on device (no dead-row D2H)


class VanillaGANPallas:
    """JAX/Pallas port of VanillaGAN.forward (generation path only)."""

    def __init__(self, key):
        k1, k2, k3, k4 = jax.random.split(key, 4)
        # PyTorch nn.Linear default init: U(-1/sqrt(fan_in), 1/sqrt(fan_in))
        lim1 = 1.0 / np.sqrt(Z_DIM)
        lim2 = 1.0 / np.sqrt(HIDDEN)
        # Weights stored bf16 (MXU-native, halves weight DMA bytes);
        # biases stay f32 (added post-accumulation on the VPU).
        self.w1 = jax.random.uniform(k1, (Z_DIM, HIDDEN), jnp.float32,
                                     -lim1, lim1).astype(jnp.bfloat16)
        self.b1 = jax.random.uniform(k2, (1, HIDDEN), jnp.float32, -lim1, lim1)
        self.w2 = jax.random.uniform(k3, (HIDDEN, OUT_DIM), jnp.float32,
                                     -lim2, lim2).astype(jnp.bfloat16)
        self.b2 = jax.random.uniform(k4, (1, OUT_DIM), jnp.float32, -lim2, lim2)

    def sample_device(self, m, key):
        """Device-resident (m, OUT_DIM) lane-dense slab; no host sync."""
        m_pad, tm = _pad_and_tile(m)
        return _generate(m, m_pad, tm, key, self.w1, self.b1, self.w2, self.b2)

    def forward(self, m, key):
        # VanillaGAN.forward(m): generate m samples, return `.cpu().numpy()`.
        x_slab = jax.block_until_ready(self.sample_device(m, key))
        x = np.asarray(jax.device_get(x_slab))
        # NCHW reshape on the HOST array: device output stays lane-dense.
        return x.reshape(m, C, IH, IW)

    # TODO(synk): update/update_D/update_G (BCE-with-logits training steps with
    # optimizers + autograd) and load/save are not forward-pass work and are
    # not implemented as Pallas kernels.


if __name__ == "__main__":
    key = jax.random.PRNGKey(0)
    init_key, sample_key = jax.random.split(key)

    gan = VanillaGANPallas(init_key)

    M = 8  # small demo batch
    out = gan.forward(M, sample_key)
    assert out.shape == (M, C, IH, IW), out.shape
    assert out.dtype == np.float32, out.dtype
    assert np.all(np.abs(out) <= 1.0 + 1e-6)          # tanh range

    # Determinism: same key -> same samples.
    out2 = gan.forward(M, sample_key)
    np.testing.assert_array_equal(out, out2)

    # Cross-check generator math against pure JAX with the same latents
    # (regenerated from the same key — no latent export from the kernel).
    m_pad, _ = _pad_and_tile(M)
    z = jax.random.normal(sample_key, (m_pad, Z_DIM), dtype=jnp.bfloat16)[:M]
    h = jnp.dot(z, gan.w1, preferred_element_type=jnp.float32)
    h = jnp.maximum(h + gan.b1, 0.0)
    o = jnp.dot(h.astype(jnp.bfloat16), gan.w2, preferred_element_type=jnp.float32)
    ref = np.asarray(jnp.tanh(o + gan.b2)).reshape(M, C, IH, IW)
    np.testing.assert_allclose(out, ref, rtol=5e-3, atol=5e-3)

    print("KERNEL_OK")
</pallas_src>

<mosaic_0001>
module attributes {stable_mosaic.version = 11 : i64} {
  func.func @_generator_kernel(%arg0: i32, %arg1: memref<8x128xbf16, #tpu.memory_space<vmem>>, %arg2: memref<128x256xbf16, #tpu.memory_space<vmem>>, %arg3: memref<1x256xf32, #tpu.memory_space<vmem>>, %arg4: memref<256x256xbf16, #tpu.memory_space<vmem>>, %arg5: memref<1x256xf32, #tpu.memory_space<vmem>>, %arg6: memref<8x256xf32, #tpu.memory_space<vmem>>) attributes {dimension_semantics = [#tpu.dimension_semantics<parallel>], iteration_bounds = array<i64: 1>, scalar_prefetch = 0 : i64, scratch_operands = 0 : i64, tpu.core_type = #tpu.core_type<tc>, window_params = [{transform_indices = @transform_0, window_bounds = array<i64: 8, 128>}, {pipeline_mode = #tpu.pipeline_mode<synchronous>, transform_indices = @transform_1, window_bounds = array<i64: 128, 256>}, {pipeline_mode = #tpu.pipeline_mode<synchronous>, transform_indices = @transform_2, window_bounds = array<i64: 1, 256>}, {pipeline_mode = #tpu.pipeline_mode<synchronous>, transform_indices = @transform_3, window_bounds = array<i64: 256, 256>}, {pipeline_mode = #tpu.pipeline_mode<synchronous>, transform_indices = @transform_4, window_bounds = array<i64: 1, 256>}, {transform_indices = @transform_5, window_bounds = array<i64: 8, 256>}]} {
    %c0 = arith.constant 0 : index
    %c0_0 = arith.constant 0 : index
    %0 = vector.load %arg1[%c0, %c0_0] : memref<8x128xbf16, #tpu.memory_space<vmem>>, vector<8x128xbf16>
    %c0_1 = arith.constant 0 : index
    %c0_2 = arith.constant 0 : index
    %1 = vector.load %arg2[%c0_1, %c0_2] : memref<128x256xbf16, #tpu.memory_space<vmem>>, vector<128x256xbf16>
    %cst = arith.constant dense<0.000000e+00> : vector<8x256xf32>
    %2 = tpu.matmul %0, %1, %cst {dimension_numbers = #tpu.dot_dimension_numbers<[1], [0], [0], [1], [0, 0, 1, 1], [], []>} : vector<8x128xbf16>, vector<128x256xbf16>, vector<8x256xf32> -> vector<8x256xf32>
    %c0_3 = arith.constant 0 : index
    %c0_4 = arith.constant 0 : index
    %3 = vector.load %arg3[%c0_3, %c0_4] : memref<1x256xf32, #tpu.memory_space<vmem>>, vector<1x256xf32>
    %4 = vector.broadcast %3 : vector<1x256xf32> to vector<8x256xf32>
    %5 = arith.addf %2, %4 : vector<8x256xf32>
    %cst_5 = arith.constant 0.000000e+00 : f32
    %6 = vector.broadcast %cst_5 : f32 to vector<8x256xf32>
    %7 = arith.maximumf %5, %6 : vector<8x256xf32>
    %8 = arith.truncf %7 : vector<8x256xf32> to vector<8x256xbf16>
    %c0_6 = arith.constant 0 : index
    %c0_7 = arith.constant 0 : index
    %9 = vector.load %arg4[%c0_6, %c0_7] : memref<256x256xbf16, #tpu.memory_space<vmem>>, vector<256x256xbf16>
    %cst_8 = arith.constant dense<0.000000e+00> : vector<8x256xf32>
    %10 = tpu.matmul %8, %9, %cst_8 {dimension_numbers = #tpu.dot_dimension_numbers<[1], [0], [0], [1], [0, 0, 1, 1], [], []>} : vector<8x256xbf16>, vector<256x256xbf16>, vector<8x256xf32> -> vector<8x256xf32>
    %c0_9 = arith.constant 0 : index
    %c0_10 = arith.constant 0 : index
    %11 = vector.load %arg5[%c0_9, %c0_10] : memref<1x256xf32, #tpu.memory_space<vmem>>, vector<1x256xf32>
    %12 = vector.broadcast %11 : vector<1x256xf32> to vector<8x256xf32>
    %13 = arith.addf %10, %12 : vector<8x256xf32>
    %14 = math.tanh %13 : vector<8x256xf32>
    %c0_11 = arith.constant 0 : index
    %c0_12 = arith.constant 0 : index
    %15 = vector.load %arg6[%c0_11, %c0_12] : memref<8x256xf32, #tpu.memory_space<vmem>>, vector<8x256xf32>
    tpu.vector_store %arg6[%c0_11, %c0_12], %14 {strides = array<i32>} : memref<8x256xf32, #tpu.memory_space<vmem>>, vector<8x256xf32>,
    return
  }
  func.func @transform_0(%arg0: i32) -> (i32, i32) {
    %c0_i32 = arith.constant 0 : i32
    %c0_i32_0 = arith.constant 0 : i32
    return %arg0, %c0_i32 : i32, i32
  }
  func.func @transform_1(%arg0: i32) -> (i32, i32) {
    %c0_i32 = arith.constant 0 : i32
    %c0_i32_0 = arith.constant 0 : i32
    %c0_i32_1 = arith.constant 0 : i32
    return %c0_i32, %c0_i32_0 : i32, i32
  }
  func.func @transform_2(%arg0: i32) -> (i32, i32) {
    %c0_i32 = arith.constant 0 : i32
    %c0_i32_0 = arith.constant 0 : i32
    %c0_i32_1 = arith.constant 0 : i32
    return %c0_i32, %c0_i32_0 : i32, i32
  }
  func.func @transform_3(%arg0: i32) -> (i32, i32) {
    %c0_i32 = arith.constant 0 : i32
    %c0_i32_0 = arith.constant 0 : i32
    %c0_i32_1 = arith.constant 0 : i32
    return %c0_i32, %c0_i32_0 : i32, i32
  }
  func.func @transform_4(%arg0: i32) -> (i32, i32) {
    %c0_i32 = arith.constant 0 : i32
    %c0_i32_0 = arith.constant 0 : i32
    %c0_i32_1 = arith.constant 0 : i32
    return %c0_i32, %c0_i32_0 : i32, i32
  }
  func.func @transform_5(%arg0: i32) -> (i32, i32) {
    %c0_i32 = arith.constant 0 : i32
    %c0_i32_0 = arith.constant 0 : i32
    return %arg0, %c0_i32 : i32, i32
  }
}

</mosaic_0001>

<llo_original>
// kernel: _generate.1
$region0: #{_generate.1}
  #allocation0 [shape = 'u32[]', space=smem, size = 0x4, offset = 0x4, fixed_abs, tag = 'smem constant byte address 0x4 - core index']
  #allocation1 [shape = 'u32[144,128]{1,0:T(1,128)}', space=vmem, size = 0x12000, scoped, tag = 'internal scratch']
  %s0 = inlined_call_operand.vmem [shape: bf16[8,128], index: 0, kind: input, shape index: {}]
  %s1 = inlined_call_operand.hbm [shape: bf16[128,256], index: 1, kind: input, shape index: {}]
  %s2 = inlined_call_operand.vmem [shape: f32[1,256], index: 2, kind: input, shape index: {}]
  %s3 = inlined_call_operand.hbm [shape: bf16[256,256], index: 3, kind: input, shape index: {}]
  %s4 = inlined_call_operand.vmem [shape: f32[1,256], index: 4, kind: input, shape index: {}]
  %s5 = inlined_call_operand.hbm [shape: f32[8,256], index: 5, kind: output, shape index: {}]
  %s6 = sld [smem:[#allocation0]]
  $region38: #{_generate.1} parent=0
    _
  %s8 = ssub.s32 1, %s6
  %s9 = scalar_select 0, %s8, %s6
  $region1: #{_generate.1} parent=0
    #allocation2 [shape = 'u8[65536]{0}', space=vmem, size = 0x10000, scoped, tag = 'input window, operand 1, single buffered']
    #allocation3 [shape = 's32[1]{0}', space=sflag, size = 0x4, scoped, tag = 'scoped memory for _generate.1']
    #allocation4 [shape = 's32[1]{0}', space=sflag, size = 0x4, scoped, tag = 'scoped memory for _generate.1']
    #allocation5 [shape = 'u8[131072]{0}', space=vmem, size = 0x20000, scoped, tag = 'input window, operand 3, single buffered']
    #allocation6 [shape = 's32[1]{0}', space=sflag, size = 0x4, scoped, tag = 'scoped memory for _generate.1']
    #allocation7 [shape = 'u8[8192]{0}', space=vmem, size = 0x2000, scoped, tag = 'output window, operand 0, single buffered']
    %10 = vsyncpa [#allocation3], 0
    %11 = vsyncpa [#allocation6], 0
    %12 = vsyncpa [#allocation4], 0
    // Predicated region
    $region2: #{_generate.1} parent=1 // pred_check
      _
    $region3: #{_generate.1} parent=1 // pred_check_branch
      %14 = sbr.rel (0) target = $region5
    $region4: #{_generate.1} parent=1 // pred_region
      _
    $region5: #{_generate.1} parent=1 // pred_fallthru
      _
    // Predicated region
    $region6: #{_generate.1} parent=1 // pred_check
      _
    $region7: #{_generate.1} parent=1 // pred_check_branch
      %16 = sbr.rel (0) target = $region9
    $region8: #{_generate.1} parent=1 // pred_region
      %s18 = ssub.s32 2048, 2048
      %19 = vsyncadd [#allocation3], %s18
      %s20 = sshll.u32 [#allocation2], 4
      %s21 = int_to_ptr.vmem [resolvable:$true] %s20
      %26 = dma.hbm_to_vmem [thread:$0]  %s1, 2048, %s21, [#allocation3], 128, 128, 8
    $region9: #{_generate.1} parent=1 // pred_fallthru
      _
    // Predicated region
    $region10: #{_generate.1} parent=1 // pred_check
      _
    $region11: #{_generate.1} parent=1 // pred_check_branch
      %28 = sbr.rel (0) target = $region13
    $region12: #{_generate.1} parent=1 // pred_region
      _
    $region13: #{_generate.1} parent=1 // pred_fallthru
      _
    // Predicated region
    $region14: #{_generate.1} parent=1 // pred_check
      _
    $region15: #{_generate.1} parent=1 // pred_check_branch
      %30 = sbr.rel (0) target = $region17
    $region16: #{_generate.1} parent=1 // pred_region
      %s32 = ssub.s32 4096, 4096
      %33 = vsyncadd [#allocation6], %s32
      %s34 = sshll.u32 [#allocation5], 4
      %s35 = int_to_ptr.vmem [resolvable:$true] %s34
      %40 = dma.hbm_to_vmem [thread:$0]  %s3, 4096, %s35, [#allocation6], 128, 128, 8
    $region17: #{_generate.1} parent=1 // pred_fallthru
      _
    // Predicated region
    $region18: #{_generate.1} parent=1 // pred_check
      _
    $region19: #{_generate.1} parent=1 // pred_check_branch
      %42 = sbr.rel (0) target = $region21
    $region20: #{_generate.1} parent=1 // pred_region
      _
    $region21: #{_generate.1} parent=1 // pred_fallthru
      _
    // Predicated region
    $region22: #{_generate.1} parent=1 // pred_check
      _
    $region23: #{_generate.1} parent=1 // pred_check_branch
      %44 = sbr.rel (0) target = $region25
    $region24: #{_generate.1} parent=1 // pred_region
      %45 = dma.done [#allocation3], 2048
    $region25: #{_generate.1} parent=1 // pred_fallthru
      _
    // Predicated region
    $region26: #{_generate.1} parent=1 // pred_check
      _
    $region27: #{_generate.1} parent=1 // pred_check_branch
      %47 = sbr.rel (0) target = $region29
    $region28: #{_generate.1} parent=1 // pred_region
      %48 = dma.done [#allocation6], 4096
    $region29: #{_generate.1} parent=1 // pred_fallthru
      _
    %v50 = vld [vmem:[%s0] sm:$0xf]
    %v51 = vld [vmem:[#allocation2] sm:$0xff]
    %v52 = vld [vmem:[#allocation2 + $0x8] sm:$0xff]
    %v53 = vld [vmem:[#allocation2 + $0x10] sm:$0xff]
    %v54 = vld [vmem:[#allocation2 + $0x18] sm:$0xff]
    %v55 = vld [vmem:[#allocation2 + $0x20] sm:$0xff]
    %v56 = vld [vmem:[#allocation2 + $0x28] sm:$0xff]
    %v57 = vld [vmem:[#allocation2 + $0x30] sm:$0xff]
    %v58 = vld [vmem:[#allocation2 + $0x38] sm:$0xff]
    %v59 = vld [vmem:[#allocation2 + $0x40] sm:$0xff]
    %v60 = vld [vmem:[#allocation2 + $0x48] sm:$0xff]
    %v61 = vld [vmem:[#allocation2 + $0x50] sm:$0xff]
    %v62 = vld [vmem:[#allocation2 + $0x58] sm:$0xff]
    %v63 = vld [vmem:[#allocation2 + $0x60] sm:$0xff]
    %v64 = vld [vmem:[#allocation2 + $0x68] sm:$0xff]
    %v65 = vld [vmem:[#allocation2 + $0x70] sm:$0xff]
    %v66 = vld [vmem:[#allocation2 + $0x78] sm:$0xff]
    %v67 = vld [vmem:[%s2] sm:$0x3]
    %v69 = vlaneseq
    %v70 = vshrl.u32 %v69, 7
    %v71 = vsub.s32 0, %v70
    %v72 = vrot.slane %v67, %v71
    %v73 = vlaneseq
    %v74 = vshrl.u32 %v73, 7
    %v75 = vsub.s32 1, %v74
    %v76 = vrot.slane %v67, %v75
    %v95 = vunpack.c.l.b16 %v51
    %v96 = vunpack.c.h.b16 %v51
    %v97 = vunpack.c.l.b16 %v52
    %v98 = vunpack.c.h.b16 %v52
    %v99 = vunpack.c.l.b16 %v53
    %v100 = vunpack.c.h.b16 %v53
    %v101 = vunpack.c.l.b16 %v54
    %v102 = vunpack.c.h.b16 %v54
    %v103 = vunpack.c.l.b16 %v55
    %v104 = vunpack.c.h.b16 %v55
    %v105 = vunpack.c.l.b16 %v56
    %v106 = vunpack.c.h.b16 %v56
    %v107 = vunpack.c.l.b16 %v57
    %v108 = vunpack.c.h.b16 %v57
    %v109 = vunpack.c.l.b16 %v58
    %v110 = vunpack.c.h.b16 %v58
    %v111 = vunpack.c.l.b16 %v59
    %v112 = vunpack.c.h.b16 %v59
    %v113 = vunpack.c.l.b16 %v60
    %v114 = vunpack.c.h.b16 %v60
    %v115 = vunpack.c.l.b16 %v61
    %v116 = vunpack.c.h.b16 %v61
    %v117 = vunpack.c.l.b16 %v62
    %v118 = vunpack.c.h.b16 %v62
    %v119 = vunpack.c.l.b16 %v63
    %v120 = vunpack.c.h.b16 %v63
    %v121 = vunpack.c.l.b16 %v64
    %v122 = vunpack.c.h.b16 %v64
    %v123 = vunpack.c.l.b16 %v65
    %v124 = vunpack.c.h.b16 %v65
    %v125 = vunpack.c.l.b16 %v66
    %v126 = vunpack.c.h.b16 %v66
    %v127 = vpack.c.b16 %v97, %v95
    %v128 = vpack.c.b16 %v98, %v96
    %v129 = vpack.c.b16 %v101, %v99
    %v130 = vpack.c.b16 %v102, %v100
    %v131 = vpack.c.b16 %v105, %v103
    %v132 = vpack.c.b16 %v106, %v104
    %v133 = vpack.c.b16 %v109, %v107
    %v134 = vpack.c.b16 %v110, %v108
    %v135 = vpack.c.b16 %v113, %v111
    %v136 = vpack.c.b16 %v114, %v112
    %v137 = vpack.c.b16 %v117, %v115
    %v138 = vpack.c.b16 %v118, %v116
    %v139 = vpack.c.b16 %v121, %v119
    %v140 = vpack.c.b16 %v122, %v120
    %v141 = vpack.c.b16 %v125, %v123
    %v142 = vpack.c.b16 %v126, %v124
    %159 = vmatprep.subr.bf16.mxu0 %v128
    %160 = vmatpush1.bf16.msra.mxu0 %v127
    %161 = vmatprep.subr.bf16.mxu0 %v130
    %162 = vmatpush1.bf16.msra.mxu0 %v129
    %163 = vmatprep.subr.bf16.mxu0 %v132
    %164 = vmatpush1.bf16.msra.mxu0 %v131
    %165 = vmatprep.subr.bf16.mxu0 %v134
    %166 = vmatpush1.bf16.msra.mxu0 %v133
    %167 = vmatprep.subr.bf16.mxu0 %v136
    %168 = vmatpush1.bf16.msra.mxu0 %v135
    %169 = vmatprep.subr.bf16.mxu0 %v138
    %170 = vmatpush1.bf16.msra.mxu0 %v137
    %171 = vmatprep.subr.bf16.mxu0 %v140
    %172 = vmatpush1.bf16.msra.mxu0 %v139
    %173 = vmatprep.subr.bf16.mxu0 %v142
    %174 = vmatpush1.bf16.msra.mxu0 %v141
    %175 = vmatprep.subr.bf16.mxu0 0
    %176 = vmatpush1.bf16.msra.mxu0 0
    %177 = vmatprep.subr.bf16.mxu0 0
    %178 = vmatpush1.bf16.msra.mxu0 0
    %179 = vmatprep.subr.bf16.mxu0 0
    %180 = vmatpush1.bf16.msra.mxu0 0
    %181 = vmatprep.subr.bf16.mxu0 0
    %182 = vmatpush1.bf16.msra.mxu0 0
    %183 = vmatprep.subr.bf16.mxu0 0
    %184 = vmatpush1.bf16.msra.mxu0 0
    %185 = vmatprep.subr.bf16.mxu0 0
    %186 = vmatpush1.bf16.msra.mxu0 0
    %187 = vmatprep.subr.bf16.mxu0 0
    %188 = vmatpush1.bf16.msra.mxu0 0
    %189 = vmatprep.subr.bf16.mxu0 0
    %190 = vmatpush1.bf16.msra.mxu0 0
    %191 = vmatprep.mubr.bf16.mxu0 0
    %192 = vmatmul.mubr.bf16.gmra.mrb[0].mxu0 %v50
    %v193 = vpop.f32.mrb[0].mxu0
    %v194 = vadd.f32 %v72, %v193
    %v195 = vpop.f32.mrb[0].mxu0
    %v196 = vadd.f32 %v76, %v195
    %v197 = vpop.f32.mrb[0].mxu0
    %v198 = vpop.f32.mrb[0].mxu0
    %199 = vdwg.mxu0
    %v200 = vmax.f32 %v194, 0.0
    %v201 = vmax.f32 %v196, 0.0
    %v202 = vpack.c.bf16 %v200, %v200
    %v203 = vpack.c.bf16 %v201, %v201
    %v204 = vld [vmem:[#allocation5] sm:$0xff]
    %v205 = vld [vmem:[#allocation5 + $0x8] sm:$0xff]
    %v206 = vld [vmem:[#allocation5 + $0x10] sm:$0xff]
    %v207 = vld [vmem:[#allocation5 + $0x18] sm:$0xff]
    %v208 = vld [vmem:[#allocation5 + $0x20] sm:$0xff]
    %v209 = vld [vmem:[#allocation5 + $0x28] sm:$0xff]
    %v210 = vld [vmem:[#allocation5 + $0x30] sm:$0xff]
    %v211 = vld [vmem:[#allocation5 + $0x38] sm:$0xff]
    %v212 = vld [vmem:[#allocation5 + $0x40] sm:$0xff]
    %v213 = vld [vmem:[#allocation5 + $0x48] sm:$0xff]
    %v214 = vld [vmem:[#allocation5 + $0x50] sm:$0xff]
    %v215 = vld [vmem:[#allocation5 + $0x58] sm:$0xff]
    %v216 = vld [vmem:[#allocation5 + $0x60] sm:$0xff]
    %v217 = vld [vmem:[#allocation5 + $0x68] sm:$0xff]
    %v218 = vld [vmem:[#allocation5 + $0x70] sm:$0xff]
    %v219 = vld [vmem:[#allocation5 + $0x78] sm:$0xff]
    %v220 = vld [vmem:[#allocation5 + $0x80] sm:$0xff]
    %v221 = vld [vmem:[#allocation5 + $0x88] sm:$0xff]
    %v222 = vld [vmem:[#allocation5 + $0x90] sm:$0xff]
    %v223 = vld [vmem:[#allocation5 + $0x98] sm:$0xff]
    %v224 = vld [vmem:[#allocation5 + $0xa0] sm:$0xff]
    %v225 = vld [vmem:[#allocation5 + $0xa8] sm:$0xff]
    %v226 = vld [vmem:[#allocation5 + $0xb0] sm:$0xff]
    %v227 = vld [vmem:[#allocation5 + $0xb8] sm:$0xff]
    %v228 = vld [vmem:[#allocation5 + $0xc0] sm:$0xff]
    %v229 = vld [vmem:[#allocation5 + $0xc8] sm:$0xff]
    %v230 = vld [vmem:[#allocation5 + $0xd0] sm:$0xff]
    %v231 = vld [vmem:[#allocation5 + $0xd8] sm:$0xff]
    %v232 = vld [vmem:[#allocation5 + $0xe0] sm:$0xff]
    %v233 = vld [vmem:[#allocation5 + $0xe8] sm:$0xff]
    %v234 = vld [vmem:[#allocation5 + $0xf0] sm:$0xff]
    %v235 = vld [vmem:[#allocation5 + $0xf8] sm:$0xff]
    %v236 = vld [vmem:[%s4] sm:$0x3]
    %v238 = vlaneseq
    %v239 = vshrl.u32 %v238, 7
    %v240 = vsub.s32 0, %v239
    %v241 = vrot.slane %v236, %v240
    %v242 = vlaneseq
    %v243 = vshrl.u32 %v242, 7
    %v244 = vsub.s32 1, %v243
    %v245 = vrot.slane %v236, %v244
    %v280 = vunpack.c.l.b16 %v204
    %v281 = vunpack.c.h.b16 %v204
    %v282 = vunpack.c.l.b16 %v205
    %v283 = vunpack.c.h.b16 %v205
    %v284 = vunpack.c.l.b16 %v206
    %v285 = vunpack.c.h.b16 %v206
    %v286 = vunpack.c.l.b16 %v207
    %v287 = vunpack.c.h.b16 %v207
    %v288 = vunpack.c.l.b16 %v208
    %v289 = vunpack.c.h.b16 %v208
    %v290 = vunpack.c.l.b16 %v209
    %v291 = vunpack.c.h.b16 %v209
    %v292 = vunpack.c.l.b16 %v210
    %v293 = vunpack.c.h.b16 %v210
    %v294 = vunpack.c.l.b16 %v211
    %v295 = vunpack.c.h.b16 %v211
    %v296 = vunpack.c.l.b16 %v212
    %v297 = vunpack.c.h.b16 %v212
    %v298 = vunpack.c.l.b16 %v213
    %v299 = vunpack.c.h.b16 %v213
    %v300 = vunpack.c.l.b16 %v214
    %v301 = vunpack.c.h.b16 %v214
    %v302 = vunpack.c.l.b16 %v215
    %v303 = vunpack.c.h.b16 %v215
    %v304 = vunpack.c.l.b16 %v216
    %v305 = vunpack.c.h.b16 %v216
    %v306 = vunpack.c.l.b16 %v217
    %v307 = vunpack.c.h.b16 %v217
    %v308 = vunpack.c.l.b16 %v218
    %v309 = vunpack.c.h.b16 %v218
    %v310 = vunpack.c.l.b16 %v219
    %v311 = vunpack.c.h.b16 %v219
    %v312 = vunpack.c.l.b16 %v220
    %v313 = vunpack.c.h.b16 %v220
    %v314 = vunpack.c.l.b16 %v221
    %v315 = vunpack.c.h.b16 %v221
    %v316 = vunpack.c.l.b16 %v222
    %v317 = vunpack.c.h.b16 %v222
    %v318 = vunpack.c.l.b16 %v223
    %v319 = vunpack.c.h.b16 %v223
    %v320 = vunpack.c.l.b16 %v224
    %v321 = vunpack.c.h.b16 %v224
    %v322 = vunpack.c.l.b16 %v225
    %v323 = vunpack.c.h.b16 %v225
    %v324 = vunpack.c.l.b16 %v226
    %v325 = vunpack.c.h.b16 %v226
    %v326 = vunpack.c.l.b16 %v227
    %v327 = vunpack.c.h.b16 %v227
    %v328 = vunpack.c.l.b16 %v228
    %v329 = vunpack.c.h.b16 %v228
    %v330 = vunpack.c.l.b16 %v229
    %v331 = vunpack.c.h.b16 %v229
    %v332 = vunpack.c.l.b16 %v230
    %v333 = vunpack.c.h.b16 %v230
    %v334 = vunpack.c.l.b16 %v231
    %v335 = vunpack.c.h.b16 %v231
    %v336 = vunpack.c.l.b16 %v232
    %v337 = vunpack.c.h.b16 %v232
    %v338 = vunpack.c.l.b16 %v233
    %v339 = vunpack.c.h.b16 %v233
    %v340 = vunpack.c.l.b16 %v234
    %v341 = vunpack.c.h.b16 %v234
    %v342 = vunpack.c.l.b16 %v235
    %v343 = vunpack.c.h.b16 %v235
    %v344 = vpack.c.b16 %v282, %v280
    %v345 = vpack.c.b16 %v283, %v281
    %v346 = vpack.c.b16 %v286, %v284
    %v347 = vpack.c.b16 %v287, %v285
    %v348 = vpack.c.b16 %v290, %v288
    %v349 = vpack.c.b16 %v291, %v289
    %v350 = vpack.c.b16 %v294, %v292
    %v351 = vpack.c.b16 %v295, %v293
    %v352 = vpack.c.b16 %v298, %v296
    %v353 = vpack.c.b16 %v299, %v297
    %v354 = vpack.c.b16 %v302, %v300
    %v355 = vpack.c.b16 %v303, %v301
    %v356 = vpack.c.b16 %v306, %v304
    %v357 = vpack.c.b16 %v307, %v305
    %v358 = vpack.c.b16 %v310, %v308
    %v359 = vpack.c.b16 %v311, %v309
    %v360 = vpack.c.b16 %v314, %v312
    %v361 = vpack.c.b16 %v315, %v313
    %v362 = vpack.c.b16 %v318, %v316
    %v363 = vpack.c.b16 %v319, %v317
    %v364 = vpack.c.b16 %v322, %v320
    %v365 = vpack.c.b16 %v323, %v321
    %v366 = vpack.c.b16 %v326, %v324
    %v367 = vpack.c.b16 %v327, %v325
    %v368 = vpack.c.b16 %v330, %v328
    %v369 = vpack.c.b16 %v331, %v329
    %v370 = vpack.c.b16 %v334, %v332
    %v371 = vpack.c.b16 %v335, %v333
    %v372 = vpack.c.b16 %v338, %v336
    %v373 = vpack.c.b16 %v339, %v337
    %v374 = vpack.c.b16 %v342, %v340
    %v375 = vpack.c.b16 %v343, %v341
    %408 = vmatprep.subr.bf16.mxu0 %v345
    %409 = vmatpush1.bf16.msra.mxu0 %v344
    %410 = vmatprep.subr.bf16.mxu0 %v347
    %411 = vmatpush1.bf16.msra.mxu0 %v346
    %412 = vmatprep.subr.bf16.mxu0 %v349
    %413 = vmatpush1.bf16.msra.mxu0 %v348
    %414 = vmatprep.subr.bf16.mxu0 %v351
    %415 = vmatpush1.bf16.msra.mxu0 %v350
    %416 = vmatprep.subr.bf16.mxu0 %v353
    %417 = vmatpush1.bf16.msra.mxu0 %v352
    %418 = vmatprep.subr.bf16.mxu0 %v355
    %419 = vmatpush1.bf16.msra.mxu0 %v354
    %420 = vmatprep.subr.bf16.mxu0 %v357
    %421 = vmatpush1.bf16.msra.mxu0 %v356
    %422 = vmatprep.subr.bf16.mxu0 %v359
    %423 = vmatpush1.bf16.msra.mxu0 %v358
    %424 = vmatprep.subr.bf16.mxu0 %v361
    %425 = vmatpush1.bf16.msra.mxu0 %v360
    %426 = vmatprep.subr.bf16.mxu0 %v363
    %427 = vmatpush1.bf16.msra.mxu0 %v362
    %428 = vmatprep.subr.bf16.mxu0 %v365
    %429 = vmatpush1.bf16.msra.mxu0 %v364
    %430 = vmatprep.subr.bf16.mxu0 %v367
    %431 = vmatpush1.bf16.msra.mxu0 %v366
    %432 = vmatprep.subr.bf16.mxu0 %v369
    %433 = vmatpush1.bf16.msra.mxu0 %v368
    %434 = vmatprep.subr.bf16.mxu0 %v371
    %435 = vmatpush1.bf16.msra.mxu0 %v370
    %436 = vmatprep.subr.bf16.mxu0 %v373
    %437 = vmatpush1.bf16.msra.mxu0 %v372
    %438 = vmatprep.subr.bf16.mxu0 %v375
    %439 = vmatpush1.bf16.msra.mxu0 %v374
    %440 = vmatprep.mubr.bf16.mxu0 %v203
    %441 = vmatmul.mubr.bf16.gmra.mrb[0].mxu0 %v202
    %v442 = vpop.f32.mrb[0].mxu0
    %v443 = vadd.f32 %v241, %v442
    %v444 = vpop.f32.mrb[0].mxu0
    %v445 = vadd.f32 %v245, %v444
    %v446 = vpop.f32.mrb[0].mxu0
    %v447 = vpop.f32.mrb[0].mxu0
    %448 = vdwg.mxu0
    %v449 = vtanh.pop %v443
    %v450 = vtanh.pop %v445
    %451 = vst [vmem:[#allocation7] sm:$0xff] %v449
    %452 = vst [vmem:[#allocation7 + $0x8] sm:$0xff] %v450
    // Predicated region
    $region30: #{_generate.1} parent=1 // pred_check
      _
    $region31: #{_generate.1} parent=1 // pred_check_branch
      %454 = sbr.rel (0) target = $region33
    $region32: #{_generate.1} parent=1 // pred_region
      %s456 = ssub.s32 256, 256
      %457 = vsyncadd [#allocation4], %s456
      %s459 = sshll.u32 [#allocation7], 4
      %s460 = int_to_ptr.vmem [resolvable:$true] %s459
      %462 = dma.vmem_to_hbm [thread:$0]  %s460, 256, %s5, [#allocation4]
    $region33: #{_generate.1} parent=1 // pred_fallthru
      _
    // Predicated region
    $region34: #{_generate.1} parent=1 // pred_check
      _
    $region35: #{_generate.1} parent=1 // pred_check_branch
      %464 = sbr.rel (0) target = $region37
    $region36: #{_generate.1} parent=1 // pred_region
      %465 = dma.done [#allocation4], 256
    $region37: #{_generate.1} parent=1 // pred_fallthru
      _
    %466 = vsyncpa [#allocation3], 1
    %467 = vsyncpa [#allocation6], 1
    %468 = vsyncpa [#allocation4], 1

</llo_original>
